<compile_context>
chip_gen: v7x
topology: tpu7x:2x2x1
jax: 0.10.0
libtpu: 0.0.40
codegen_flags: <defaults>
</compile_context>

<pallas_src>
from functools import partial

import jax
import jax.numpy as jnp
from jax.experimental import pallas as pl
from jax.experimental.pallas import tpu as pltpu


def _make_divisible(v, divisor, min_value=None):
    if min_value is None:
        min_value = divisor
    new_v = max(min_value, int(v + divisor / 2) // divisor * divisor)
    if new_v < 0.9 * v:
        new_v += divisor
    return new_v


# --------------------------------------------------------------------------
# Fused single-pass kernel: pool + fc1/ReLU + fc2 + hardsigmoid + multiply.
# --------------------------------------------------------------------------
def _fused_se_kernel(x_ref, w1_ref, b1_ref, w2_ref, b2_ref, o_ref, *, inv_hw):
    x = x_ref[0]                                            # (C, HW) native dtype
    # Global average pool as a ones-matmul -> rides the (idle) MXU with f32
    # accumulation; x stays in its native dtype (bf16-native on v6e/v7x).
    ones = jnp.ones((x.shape[1], 1), dtype=x.dtype)
    pooled = jnp.dot(x, ones, preferred_element_type=jnp.float32) * inv_hw  # (C,1)
    # fc1 (1x1 conv): (S, C) @ (C, 1) + (S, 1), ReLU
    h = jnp.dot(w1_ref[...], pooled,
                preferred_element_type=jnp.float32) + b1_ref[...]
    h = jnp.maximum(h, 0.0)
    # fc2: (C, S) @ (S, 1) + (C, 1)
    s = jnp.dot(w2_ref[...], h,
                preferred_element_type=jnp.float32) + b2_ref[...]
    # hardsigmoid: relu6(s + 3) / 6 == clip(s/6 + 0.5, 0, 1)
    s = jnp.clip(s * (1.0 / 6.0) + 0.5, 0.0, 1.0)
    # Broadcast multiply in x's native dtype (no full-tile f32 temporary).
    o_ref[0] = x * s.astype(x.dtype)


# --------------------------------------------------------------------------
# Two-pass fallback (only for slabs too big for the fused path).
# --------------------------------------------------------------------------
def _pool_fc_kernel(x_ref, w1_ref, b1_ref, w2_ref, b2_ref, scale_ref, acc_ref,
                    *, hw, thw, inv_hw, mask_needed):
    # grid = (N, n_hw_tiles); axis 1 is the spatial reduction (cdiv grid).
    t = pl.program_id(1)

    @pl.when(t == 0)
    def _():
        acc_ref[...] = jnp.zeros_like(acc_ref)

    xb = x_ref[0]                                           # (C, thw) native dtype
    if mask_needed:
        # Zero the out-of-range lanes of the (possibly partial) final tile so
        # padding garbage does not corrupt the mean.
        lane = jax.lax.broadcasted_iota(jnp.int32, xb.shape, 1)
        xb = jnp.where(t * thw + lane < hw, xb, jnp.zeros_like(xb))
    ones = jnp.ones((xb.shape[1], 1), dtype=xb.dtype)
    acc_ref[...] += jnp.dot(xb, ones, preferred_element_type=jnp.float32)

    @pl.when(t == pl.num_programs(1) - 1)
    def _():
        pooled = acc_ref[...] * inv_hw                      # (C, 1) f32
        h = jnp.dot(w1_ref[...], pooled,
                    preferred_element_type=jnp.float32) + b1_ref[...]
        h = jnp.maximum(h, 0.0)
        s = jnp.dot(w2_ref[...], h,
                    preferred_element_type=jnp.float32) + b2_ref[...]
        scale_ref[0] = jnp.clip(s * (1.0 / 6.0) + 0.5, 0.0, 1.0)


def _scale_mul_kernel(scale_ref, x_ref, o_ref):
    x = x_ref[0]                                            # (C, thw)
    s = scale_ref[0].astype(x.dtype)                        # (C, 1)
    o_ref[0] = x * s


def _pick_hw_tile(hw, c, dtype_bytes, budget_bytes=8 * 1024 * 1024,
                  max_lanes=2048):
    """Largest 128-multiple lane tile whose double-buffered in+out blocks fit
    the VMEM budget (conservative for v5e's 16 MiB scoped default; v6e/v7x
    have more headroom)."""
    if hw < 128:
        return hw                                           # full-dim block
    t_budget = budget_bytes // (4 * c * dtype_bytes)
    t = min(t_budget, max_lanes, hw)
    t = (t // 128) * 128
    return max(t, 128)


def pcq_squeeze_excitation(x_nchw, w1, b1, w2, b2, *,
                           fused_vmem_budget_bytes=12 * 1024 * 1024,
                           force_two_pass=False):
    """Eval-mode PCQSqueezeExcitation forward.

    x_nchw: (N, C, H, W).  w1: (S, C), b1: (S, 1), w2: (C, S), b2: (C, 1)
    (the natural PyTorch 1x1-conv weight layouts, kernel dims squeezed).
    """
    N, C, H, W = x_nchw.shape
    HW = H * W
    S = w1.shape[0]
    dtype_bytes = x_nchw.dtype.itemsize

    # Free view: NCHW -> (N, C, HW).  HW on the lane axis (lane-dense).
    x = x_nchw.reshape(N, C, HW)

    weight_bytes = (S * C + S + C * S + C) * w1.dtype.itemsize

    fused_fits = (4 * C * HW * dtype_bytes) <= fused_vmem_budget_bytes
    if fused_fits and not force_two_pass:
        # ---- single fused pass: x read once, written once (2x HBM traffic).
        flops = N * (2 * C * HW + 4 * S * C + C * HW)
        bytes_accessed = 2 * N * C * HW * dtype_bytes + weight_bytes
        out = pl.pallas_call(
            partial(_fused_se_kernel, inv_hw=1.0 / float(HW)),
            out_shape=jax.ShapeDtypeStruct((N, C, HW), x.dtype),
            grid_spec=pltpu.PrefetchScalarGridSpec(
                num_scalar_prefetch=0,
                grid=(N,),
                in_specs=[
                    pl.BlockSpec((1, C, HW), lambda n: (n, 0, 0)),
                    pl.BlockSpec((S, C), lambda n: (0, 0)),
                    pl.BlockSpec((S, 1), lambda n: (0, 0)),
                    pl.BlockSpec((C, S), lambda n: (0, 0)),
                    pl.BlockSpec((C, 1), lambda n: (0, 0)),
                ],
                out_specs=pl.BlockSpec((1, C, HW), lambda n: (n, 0, 0)),
            ),
            compiler_params=pltpu.CompilerParams(
                dimension_semantics=("parallel",)),
            cost_estimate=pl.CostEstimate(flops=flops, transcendentals=0,
                                          bytes_accessed=bytes_accessed),
        )(x, w1, b1, w2, b2)
        return out.reshape(N, C, H, W)

    # ---- fallback: two passes, HW tiled with a cdiv grid + lane masking.
    thw = _pick_hw_tile(HW, C, dtype_bytes)
    n_t = pl.cdiv(HW, thw)
    mask_needed = (HW % thw) != 0

    # pass 1: global-avg-pool + fc1/ReLU + fc2 + hardsigmoid -> (N, C, 1).
    # (At N=1 on v7x this pass runs on a single core; a 2-way HW split with a
    #  partial-sum combine epilogue would recover the second core.)
    scale = pl.pallas_call(
        partial(_pool_fc_kernel, hw=HW, thw=thw, inv_hw=1.0 / float(HW),
                mask_needed=mask_needed),
        out_shape=jax.ShapeDtypeStruct((N, C, 1), jnp.float32),
        grid_spec=pltpu.PrefetchScalarGridSpec(
            num_scalar_prefetch=0,
            grid=(N, n_t),
            in_specs=[
                pl.BlockSpec((1, C, thw), lambda n, t: (n, 0, t)),
                pl.BlockSpec((S, C), lambda n, t: (0, 0)),
                pl.BlockSpec((S, 1), lambda n, t: (0, 0)),
                pl.BlockSpec((C, S), lambda n, t: (0, 0)),
                pl.BlockSpec((C, 1), lambda n, t: (0, 0)),
            ],
            out_specs=pl.BlockSpec((1, C, 1), lambda n, t: (n, 0, 0)),
            scratch_shapes=[pltpu.VMEM((C, 1), jnp.float32)],
        ),
        compiler_params=pltpu.CompilerParams(
            dimension_semantics=("parallel", "arbitrary")),
        cost_estimate=pl.CostEstimate(
            flops=N * (2 * C * HW + 4 * S * C), transcendentals=0,
            bytes_accessed=N * C * HW * dtype_bytes + weight_bytes + N * C * 4),
    )(x, w1, b1, w2, b2)

    # pass 2: out = scale * x, tiled over batch and HW, fully parallel.
    out = pl.pallas_call(
        _scale_mul_kernel,
        out_shape=jax.ShapeDtypeStruct((N, C, HW), x.dtype),
        grid_spec=pltpu.PrefetchScalarGridSpec(
            num_scalar_prefetch=0,
            grid=(N, n_t),
            in_specs=[
                pl.BlockSpec((1, C, 1), lambda n, t: (n, 0, 0)),
                pl.BlockSpec((1, C, thw), lambda n, t: (n, 0, t)),
            ],
            out_specs=pl.BlockSpec((1, C, thw), lambda n, t: (n, 0, t)),
        ),
        compiler_params=pltpu.CompilerParams(
            dimension_semantics=("parallel", "parallel")),
        cost_estimate=pl.CostEstimate(
            flops=N * C * HW, transcendentals=0,
            bytes_accessed=2 * N * C * HW * dtype_bytes + N * C * 4),
    )(scale, x)

    return out.reshape(N, C, H, W)


def _reference(x_nchw, w1, b1, w2, b2):
    # Pure-JAX reference of the eval-mode forward.
    pooled = jnp.mean(x_nchw, axis=(2, 3))                  # (N, C)
    h = jnp.maximum(pooled @ w1.T + b1[:, 0], 0.0)          # (N, S)
    s = h @ w2.T + b2[:, 0]                                 # (N, C)
    s = jnp.clip(s / 6.0 + 0.5, 0.0, 1.0)                   # hardsigmoid
    return x_nchw * s[:, :, None, None]


if __name__ == "__main__":
    # NCHW input; squeeze_channels = _make_divisible(C // 4, 8)
    N, C = 2, 16
    S = _make_divisible(C // 4, 8)                          # -> 8

    key = jax.random.PRNGKey(0)
    kx, kw1, kb1, kw2, kb2, kx2 = jax.random.split(key, 6)

    # fc1 is a 1x1 conv with weight (S, C, 1, 1) -> (S, C); fc2 is
    # (C, S, 1, 1) -> (C, S).  Biases kept as column vectors.
    w1 = jax.random.normal(kw1, (S, C), dtype=jnp.float32) * 0.1
    b1 = jax.random.normal(kb1, (S, 1), dtype=jnp.float32) * 0.1
    w2 = jax.random.normal(kw2, (C, S), dtype=jnp.float32) * 0.1
    b2 = jax.random.normal(kb2, (C, 1), dtype=jnp.float32) * 0.1

    # TODO(synk): training-mode EMA act-range tracking / per-cluster fake
    # quantization (runtime_helper driven) is host-side QAT state and is not
    # part of the eval forward; it is intentionally not implemented.

    # ---- case 1: fused single-pass path (H*W = 256).
    x1 = jax.random.normal(kx, (N, C, 16, 16), dtype=jnp.float32)
    out1 = jax.block_until_ready(pcq_squeeze_excitation(x1, w1, b1, w2, b2))
    ref1 = _reference(x1, w1, b1, w2, b2)
    assert out1.shape == x1.shape
    assert jnp.allclose(out1, ref1, atol=1e-5, rtol=1e-5)

    # ---- case 2: forced two-pass fallback with a non-128-divisible HW
    # (H*W = 196 -> cdiv grid, partial final tile, lane-masked pooling).
    x2 = jax.random.normal(kx2, (N, C, 14, 14), dtype=jnp.float32)
    out2 = jax.block_until_ready(
        pcq_squeeze_excitation(x2, w1, b1, w2, b2, force_two_pass=True))
    ref2 = _reference(x2, w1, b1, w2, b2)
    assert out2.shape == x2.shape
    assert jnp.allclose(out2, ref2, atol=1e-5, rtol=1e-5)

    print("KERNEL_OK")
</pallas_src>

<mosaic_0001>
module attributes {stable_mosaic.version = 11 : i64} {
  func.func @_fused_se_kernel(%arg0: i32, %arg1: memref<1x16x256xf32, #tpu.memory_space<vmem>>, %arg2: memref<8x16xf32, #tpu.memory_space<vmem>>, %arg3: memref<8x1xf32, #tpu.memory_space<vmem>>, %arg4: memref<16x8xf32, #tpu.memory_space<vmem>>, %arg5: memref<16x1xf32, #tpu.memory_space<vmem>>, %arg6: memref<1x16x256xf32, #tpu.memory_space<vmem>>) attributes {dimension_semantics = [#tpu.dimension_semantics<parallel>], iteration_bounds = array<i64: 2>, scalar_prefetch = 0 : i64, scratch_operands = 0 : i64, tpu.core_type = #tpu.core_type<tc>, window_params = [{transform_indices = @transform_0, window_bounds = array<i64: 1, 16, 256>}, {pipeline_mode = #tpu.pipeline_mode<synchronous>, transform_indices = @transform_1, window_bounds = array<i64: 8, 16>}, {pipeline_mode = #tpu.pipeline_mode<synchronous>, transform_indices = @transform_2, window_bounds = array<i64: 8, 1>}, {pipeline_mode = #tpu.pipeline_mode<synchronous>, transform_indices = @transform_3, window_bounds = array<i64: 16, 8>}, {pipeline_mode = #tpu.pipeline_mode<synchronous>, transform_indices = @transform_4, window_bounds = array<i64: 16, 1>}, {transform_indices = @transform_5, window_bounds = array<i64: 1, 16, 256>}]} {
    %c0 = arith.constant 0 : index
    %c0_0 = arith.constant 0 : index
    %c0_1 = arith.constant 0 : index
    %0 = vector.load %arg1[%c0, %c0_0, %c0_1] : memref<1x16x256xf32, #tpu.memory_space<vmem>>, vector<1x16x256xf32>
    %1 = vector.shape_cast %0 : vector<1x16x256xf32> to vector<16x256xf32>
    %cst = arith.constant 1.000000e+00 : f32
    %2 = vector.broadcast %cst : f32 to vector<256x1xf32>
    %cst_2 = arith.constant dense<0.000000e+00> : vector<16x1xf32>
    %3 = tpu.matmul %1, %2, %cst_2 {dimension_numbers = #tpu.dot_dimension_numbers<[1], [0], [0], [1], [0, 0, 1, 1], [], []>} : vector<16x256xf32>, vector<256x1xf32>, vector<16x1xf32> -> vector<16x1xf32>
    %cst_3 = arith.constant 3.906250e-03 : f32
    %4 = vector.broadcast %cst_3 : f32 to vector<16x1xf32>
    %5 = arith.mulf %3, %4 : vector<16x1xf32>
    %c0_4 = arith.constant 0 : index
    %c0_5 = arith.constant 0 : index
    %6 = vector.load %arg2[%c0_4, %c0_5] : memref<8x16xf32, #tpu.memory_space<vmem>>, vector<8x16xf32>
    %cst_6 = arith.constant dense<0.000000e+00> : vector<8x1xf32>
    %7 = tpu.matmul %6, %5, %cst_6 {dimension_numbers = #tpu.dot_dimension_numbers<[1], [0], [0], [1], [0, 0, 1, 1], [], []>} : vector<8x16xf32>, vector<16x1xf32>, vector<8x1xf32> -> vector<8x1xf32>
    %c0_7 = arith.constant 0 : index
    %c0_8 = arith.constant 0 : index
    %8 = vector.load %arg3[%c0_7, %c0_8] : memref<8x1xf32, #tpu.memory_space<vmem>>, vector<8x1xf32>
    %9 = arith.addf %7, %8 : vector<8x1xf32>
    %cst_9 = arith.constant 0.000000e+00 : f32
    %10 = vector.broadcast %cst_9 : f32 to vector<8x1xf32>
    %11 = arith.maximumf %9, %10 : vector<8x1xf32>
    %c0_10 = arith.constant 0 : index
    %c0_11 = arith.constant 0 : index
    %12 = vector.load %arg4[%c0_10, %c0_11] : memref<16x8xf32, #tpu.memory_space<vmem>>, vector<16x8xf32>
    %cst_12 = arith.constant dense<0.000000e+00> : vector<16x1xf32>
    %13 = tpu.matmul %12, %11, %cst_12 {dimension_numbers = #tpu.dot_dimension_numbers<[1], [0], [0], [1], [0, 0, 1, 1], [], []>} : vector<16x8xf32>, vector<8x1xf32>, vector<16x1xf32> -> vector<16x1xf32>
    %c0_13 = arith.constant 0 : index
    %c0_14 = arith.constant 0 : index
    %14 = vector.load %arg5[%c0_13, %c0_14] : memref<16x1xf32, #tpu.memory_space<vmem>>, vector<16x1xf32>
    %15 = arith.addf %13, %14 : vector<16x1xf32>
    %cst_15 = arith.constant 0.166666672 : f32
    %16 = vector.broadcast %cst_15 : f32 to vector<16x1xf32>
    %17 = arith.mulf %15, %16 : vector<16x1xf32>
    %cst_16 = arith.constant 5.000000e-01 : f32
    %18 = vector.broadcast %cst_16 : f32 to vector<16x1xf32>
    %19 = arith.addf %17, %18 : vector<16x1xf32>
    %cst_17 = arith.constant 0.000000e+00 : f32
    %cst_18 = arith.constant 1.000000e+00 : f32
    %20 = vector.broadcast %cst_17 : f32 to vector<16x1xf32>
    %21 = arith.maximumf %20, %19 : vector<16x1xf32>
    %22 = vector.broadcast %cst_18 : f32 to vector<16x1xf32>
    %23 = arith.minimumf %22, %21 : vector<16x1xf32>
    %24 = vector.broadcast %23 : vector<16x1xf32> to vector<16x256xf32>
    %25 = arith.mulf %1, %24 : vector<16x256xf32>
    %c0_19 = arith.constant 0 : index
    %c0_20 = arith.constant 0 : index
    %c0_21 = arith.constant 0 : index
    %26 = vector.load %arg6[%c0_19, %c0_20, %c0_21] : memref<1x16x256xf32, #tpu.memory_space<vmem>>, vector<1x16x256xf32>
    %27 = vector.shape_cast %26 : vector<1x16x256xf32> to vector<16x256xf32>
    %28 = vector.shape_cast %25 : vector<16x256xf32> to vector<1x16x256xf32>
    tpu.vector_store %arg6[%c0_19, %c0_20, %c0_21], %28 {strides = array<i32>} : memref<1x16x256xf32, #tpu.memory_space<vmem>>, vector<1x16x256xf32>,
    return
  }
  func.func @transform_0(%arg0: i32) -> (i32, i32, i32) {
    %c0_i32 = arith.constant 0 : i32
    %c0_i32_0 = arith.constant 0 : i32
    %c0_i32_1 = arith.constant 0 : i32
    return %arg0, %c0_i32, %c0_i32_0 : i32, i32, i32
  }
  func.func @transform_1(%arg0: i32) -> (i32, i32) {
    %c0_i32 = arith.constant 0 : i32
    %c0_i32_0 = arith.constant 0 : i32
    %c0_i32_1 = arith.constant 0 : i32
    return %c0_i32, %c0_i32_0 : i32, i32
  }
  func.func @transform_2(%arg0: i32) -> (i32, i32) {
    %c0_i32 = arith.constant 0 : i32
    %c0_i32_0 = arith.constant 0 : i32
    %c0_i32_1 = arith.constant 0 : i32
    return %c0_i32, %c0_i32_0 : i32, i32
  }
  func.func @transform_3(%arg0: i32) -> (i32, i32) {
    %c0_i32 = arith.constant 0 : i32
    %c0_i32_0 = arith.constant 0 : i32
    %c0_i32_1 = arith.constant 0 : i32
    return %c0_i32, %c0_i32_0 : i32, i32
  }
  func.func @transform_4(%arg0: i32) -> (i32, i32) {
    %c0_i32 = arith.constant 0 : i32
    %c0_i32_0 = arith.constant 0 : i32
    %c0_i32_1 = arith.constant 0 : i32
    return %c0_i32, %c0_i32_0 : i32, i32
  }
  func.func @transform_5(%arg0: i32) -> (i32, i32, i32) {
    %c0_i32 = arith.constant 0 : i32
    %c0_i32_0 = arith.constant 0 : i32
    %c0_i32_1 = arith.constant 0 : i32
    return %arg0, %c0_i32, %c0_i32_0 : i32, i32, i32
  }
}

</mosaic_0001>

<llo_original>
// kernel: tpu_custom_call.1
$region0: #{tpu_custom_call.1}
  #allocation0 [shape = 'u32[]', space=smem, size = 0x4, offset = 0x4, fixed_abs, tag = 'smem constant byte address 0x4 - core index']
  #allocation1 [shape = 'u32[144,128]{1,0:T(1,128)}', space=vmem, size = 0x12000, scoped, tag = 'internal scratch']
  %s0 = inlined_call_operand.hbm [shape: f32[2,16,256], index: 0, kind: input, shape index: {}]
  %s1 = inlined_call_operand.vmem [shape: f32[8,16], index: 1, kind: input, shape index: {}]
  %s2 = inlined_call_operand.vmem [shape: f32[8,1], index: 2, kind: input, shape index: {}]
  %s3 = inlined_call_operand.vmem [shape: f32[16,8], index: 3, kind: input, shape index: {}]
  %s4 = inlined_call_operand.vmem [shape: f32[16,1], index: 4, kind: input, shape index: {}]
  %s5 = inlined_call_operand.hbm [shape: f32[2,16,256], index: 5, kind: output, shape index: {}]
  %s6 = sld [smem:[#allocation0]]
  $region57: #{tpu_custom_call.1} parent=0
    _
  %s8 = ssub.s32 1, %s6
  %s9 = scalar_select 0, %s8, %s6
  $region1: #{tpu_custom_call.1} parent=0
    #allocation2 [shape = 'u8[32768]{0}', space=vmem, size = 0x8000, scoped, tag = 'input window, operand 0']
    #allocation3 [shape = 's32[2]{0}', space=sflag, size = 0x8, scoped, tag = 'scoped memory for tpu_custom_call.1']
    #allocation4 [shape = 's32[2]{0}', space=sflag, size = 0x8, scoped, tag = 'scoped memory for tpu_custom_call.1']
    #allocation5 [shape = 'u8[32768]{0}', space=vmem, size = 0x8000, scoped, tag = 'output window, operand 0']
    %10 = vsyncpa [#allocation3], 0
    %s11 = scalar_lea.sflag [#allocation3], 1
    %12 = vsyncpa %s11, 0
    %13 = vsyncpa [#allocation4], 0
    %s14 = scalar_lea.sflag [#allocation4], 1
    %15 = vsyncpa %s14, 0
    loop: start=0, step=1, limit=4
    $region2: #{tpu_custom_call.1} parent=1 // loop_pre_header
      _
    $region3: #{tpu_custom_call.1} parent=1 // loop_header
      %s17 = sphi 0, %s21
      %p18 = scmp.ge.s32.totalorder %s17, 4
      %s27 = sphi 0, %s29
      %s30 = sphi 0, %s27
      %s31 = sphi 0, %s30
      %s47 = sphi 0, %s31
      %s51 = sphi 0, %s51
      %s53 = sphi 0, %s51
      %s54 = sphi 0, %s53
      %s68 = sphi 0, %s54
      %s72 = sphi 0, %s72
      %s74 = sphi 0, %s72
      %s75 = sphi 0, %s74
      %s89 = sphi 0, %s75
      %s93 = sphi 0, %s93
      %s95 = sphi 0, %s93
      %s96 = sphi 0, %s95
      %s110 = sphi 0, %s96
      %s114 = sphi 0, %s114
      %s116 = sphi 0, %s114
      %s117 = sphi 0, %s116
      %s131 = sphi 0, %s117
      %s137 = sphi 0, %s139
      %s140 = sphi 0, %s137
      %s141 = sphi 0, %s140
      %s157 = sphi 0, %s141
    $region4: #{tpu_custom_call.1} parent=1 // loop_header_branch
      %20 = sbr.rel (%p18) target = $region8
    $region5: #{tpu_custom_call.1} parent=1 // loop_body
      %s22 = ssub.s32 %s17, 1
      %s23 = ssub.s32 %s17, 2
      %s24 = sadd.s32 %s17, 1
      %s25 = ssub.s32 %s17, %s24
      %p26 = scmp.eq.s32.totalorder %s25, 0
      %s28 = sadd.s32 %s27, 1
      %s29 = scalar_select %p26, %s27, %s28
      %p32 = pneg %p26
      %p33 = scmp.eq.s32.totalorder %s17, 1
      %p34 = por %p32, %p33
      %p35 = scmp.ne.s32.totalorder %s27, %s30
      %p36 = scmp.eq.s32.totalorder %s17, 0
      %p37 = por %p35, %p36
      %p38 = scmp.ne.s32.totalorder %s27, %s30
      %p39 = scmp.eq.s32.totalorder %s22, 1
      %p40 = por %p38, %p39
      %p41 = scmp.ne.s32.totalorder %s30, %s31
      %p42 = scmp.eq.s32.totalorder %s22, 0
      %p43 = por %p41, %p42
      %p44 = scmp.ne.s32.totalorder %s30, %s31
      %p45 = scmp.eq.s32.totalorder %s23, 1
      %p46 = por %p44, %p45
      %p48 = scmp.ne.s32.totalorder %s31, %s47
      %p49 = scmp.eq.s32.totalorder %s23, 0
      %p50 = por %p48, %p49
      %s52 = sadd.s32 %s51, 1
      %p55 = scmp.eq.s32.totalorder %s17, 1
      %p56 = scmp.ne.s32.totalorder %s51, %s53
      %p57 = scmp.eq.s32.totalorder %s17, 0
      %p58 = por %p56, %p57
      %p59 = scmp.ne.s32.totalorder %s51, %s53
      %p60 = scmp.eq.s32.totalorder %s22, 1
      %p61 = por %p59, %p60
      %p62 = scmp.ne.s32.totalorder %s53, %s54
      %p63 = scmp.eq.s32.totalorder %s22, 0
      %p64 = por %p62, %p63
      %p65 = scmp.ne.s32.totalorder %s53, %s54
      %p66 = scmp.eq.s32.totalorder %s23, 1
      %p67 = por %p65, %p66
      %p69 = scmp.ne.s32.totalorder %s54, %s68
      %p70 = scmp.eq.s32.totalorder %s23, 0
      %p71 = por %p69, %p70
      %s73 = sadd.s32 %s72, 1
      %p76 = scmp.eq.s32.totalorder %s17, 1
      %p77 = scmp.ne.s32.totalorder %s72, %s74
      %p78 = scmp.eq.s32.totalorder %s17, 0
      %p79 = por %p77, %p78
      %p80 = scmp.ne.s32.totalorder %s72, %s74
      %p81 = scmp.eq.s32.totalorder %s22, 1
      %p82 = por %p80, %p81
      %p83 = scmp.ne.s32.totalorder %s74, %s75
      %p84 = scmp.eq.s32.totalorder %s22, 0
      %p85 = por %p83, %p84
      %p86 = scmp.ne.s32.totalorder %s74, %s75
      %p87 = scmp.eq.s32.totalorder %s23, 1
      %p88 = por %p86, %p87
      %p90 = scmp.ne.s32.totalorder %s75, %s89
      %p91 = scmp.eq.s32.totalorder %s23, 0
      %p92 = por %p90, %p91
      %s94 = sadd.s32 %s93, 1
      %p97 = scmp.eq.s32.totalorder %s17, 1
      %p98 = scmp.ne.s32.totalorder %s93, %s95
      %p99 = scmp.eq.s32.totalorder %s17, 0
      %p100 = por %p98, %p99
      %p101 = scmp.ne.s32.totalorder %s93, %s95
      %p102 = scmp.eq.s32.totalorder %s22, 1
      %p103 = por %p101, %p102
      %p104 = scmp.ne.s32.totalorder %s95, %s96
      %p105 = scmp.eq.s32.totalorder %s22, 0
      %p106 = por %p104, %p105
      %p107 = scmp.ne.s32.totalorder %s95, %s96
      %p108 = scmp.eq.s32.totalorder %s23, 1
      %p109 = por %p107, %p108
      %p111 = scmp.ne.s32.totalorder %s96, %s110
      %p112 = scmp.eq.s32.totalorder %s23, 0
      %p113 = por %p111, %p112
      %s115 = sadd.s32 %s114, 1
      %p118 = scmp.eq.s32.totalorder %s17, 1
      %p119 = scmp.ne.s32.totalorder %s114, %s116
      %p120 = scmp.eq.s32.totalorder %s17, 0
      %p121 = por %p119, %p120
      %p122 = scmp.ne.s32.totalorder %s114, %s116
      %p123 = scmp.eq.s32.totalorder %s22, 1
      %p124 = por %p122, %p123
      %p125 = scmp.ne.s32.totalorder %s116, %s117
      %p126 = scmp.eq.s32.totalorder %s22, 0
      %p127 = por %p125, %p126
      %p128 = scmp.ne.s32.totalorder %s116, %s117
      %p129 = scmp.eq.s32.totalorder %s23, 1
      %p130 = por %p128, %p129
      %p132 = scmp.ne.s32.totalorder %s117, %s131
      %p133 = scmp.eq.s32.totalorder %s23, 0
      %p134 = por %p132, %p133
      %s135 = ssub.s32 %s17, %s24
      %p136 = scmp.eq.s32.totalorder %s135, 0
      %s138 = sadd.s32 %s137, 1
      %s139 = scalar_select %p136, %s137, %s138
      %p142 = pneg %p136
      %p143 = scmp.eq.s32.totalorder %s17, 1
      %p144 = por %p142, %p143
      %p145 = scmp.ne.s32.totalorder %s137, %s140
      %p146 = scmp.eq.s32.totalorder %s17, 0
      %p147 = por %p145, %p146
      %p148 = scmp.ne.s32.totalorder %s137, %s140
      %p149 = scmp.eq.s32.totalorder %s22, 1
      %p150 = por %p148, %p149
      %p151 = scmp.ne.s32.totalorder %s140, %s141
      %p152 = scmp.eq.s32.totalorder %s22, 0
      %p153 = por %p151, %p152
      %p154 = scmp.ne.s32.totalorder %s140, %s141
      %p155 = scmp.eq.s32.totalorder %s23, 1
      %p156 = por %p154, %p155
      %p158 = scmp.ne.s32.totalorder %s141, %s157
      %p159 = scmp.eq.s32.totalorder %s23, 0
      %p160 = por %p158, %p159
      %p161 = scmp.le.s32.totalorder 1, %s17
      %p162 = scmp.lt.s32.totalorder %s17, 3
      %p163 = pnand %p161, %p162
      %p164 = pneg %p163
      // Predicated region
      $region9: #{tpu_custom_call.1} parent=5 // pred_check
        _
      $region10: #{tpu_custom_call.1} parent=5 // pred_check_branch
        %166 = sbr.rel (%p163) target = $region12
      $region11: #{tpu_custom_call.1} parent=5 // pred_region
        %s167 = ssub.s32 %s17, 1
        // Predicated region
        $region13: #{tpu_custom_call.1} parent=11 // pred_check
          %p168 = pneg %p64
        $region14: #{tpu_custom_call.1} parent=11 // pred_check_branch
          %170 = sbr.rel (%p168) target = $region16
        $region15: #{tpu_custom_call.1} parent=11 // pred_region
          _
        $region16: #{tpu_custom_call.1} parent=11 // pred_fallthru
          _
        // Predicated region
        $region17: #{tpu_custom_call.1} parent=11 // pred_check
          %p171 = pneg %p85
        $region18: #{tpu_custom_call.1} parent=11 // pred_check_branch
          %173 = sbr.rel (%p171) target = $region20
        $region19: #{tpu_custom_call.1} parent=11 // pred_region
          _
        $region20: #{tpu_custom_call.1} parent=11 // pred_fallthru
          _
        // Predicated region
        $region21: #{tpu_custom_call.1} parent=11 // pred_check
          %p174 = pneg %p106
        $region22: #{tpu_custom_call.1} parent=11 // pred_check_branch
          %176 = sbr.rel (%p174) target = $region24
        $region23: #{tpu_custom_call.1} parent=11 // pred_region
          _
        $region24: #{tpu_custom_call.1} parent=11 // pred_fallthru
          _
        // Predicated region
        $region25: #{tpu_custom_call.1} parent=11 // pred_check
          %p177 = pneg %p127
        $region26: #{tpu_custom_call.1} parent=11 // pred_check_branch
          %179 = sbr.rel (%p177) target = $region28
        $region27: #{tpu_custom_call.1} parent=11 // pred_region
          _
        $region28: #{tpu_custom_call.1} parent=11 // pred_fallthru
          _
      $region12: #{tpu_custom_call.1} parent=5 // pred_fallthru
        _
      %p180 = scmp.lt.s32.totalorder %s17, 2
      // Predicated region
      $region29: #{tpu_custom_call.1} parent=5 // pred_check
        %p181 = pneg %p180
      $region30: #{tpu_custom_call.1} parent=5 // pred_check_branch
        %183 = sbr.rel (%p181) target = $region32
      $region31: #{tpu_custom_call.1} parent=5 // pred_region
        // Predicated region
        $region33: #{tpu_custom_call.1} parent=31 // pred_check
          %p184 = pneg %p37
        $region34: #{tpu_custom_call.1} parent=31 // pred_check_branch
          %186 = sbr.rel (%p184) target = $region36
        $region35: #{tpu_custom_call.1} parent=31 // pred_region
          %s187 = sand.u32 %s27, 1
          %s188 = scalar_lea.sflag [#allocation3], %s187
          %s189 = sand.u32 %s27, 1
          %s190 = smul.addr %s189, 32
          %s191 = scalar_lea.vmem [#allocation2], %s190
          %s193 = ssub.s32 512, 512
          %194 = vsyncadd %s188, %s193
          %s195 = smul.addr %s17, 4
          %s196 = smul.addr %s195, 128
          %s197 = scalar_lea.hbm %s0, %s196
          %s198 = sshll.u32 %s191, 4
          %s199 = int_to_ptr.vmem [resolvable:$true] %s198
          %204 = dma.hbm_to_vmem [thread:$0]  %s197, 512, %s199, %s188, 256, 256, 16
        $region36: #{tpu_custom_call.1} parent=31 // pred_fallthru
          _
      $region32: #{tpu_custom_call.1} parent=5 // pred_fallthru
        _
      %p205 = scmp.le.s32.totalorder 1, %s17
      %p206 = scmp.lt.s32.totalorder %s17, 3
      %p207 = pnand %p205, %p206
      %p208 = pneg %p207
      // Predicated region
      $region37: #{tpu_custom_call.1} parent=5 // pred_check
        _
      $region38: #{tpu_custom_call.1} parent=5 // pred_check_branch
        %210 = sbr.rel (%p207) target = $region40
      $region39: #{tpu_custom_call.1} parent=5 // pred_region
        %s211 = ssub.s32 %s17, 1
        %s212 = sand.u32 %s30, 1
        %s213 = scalar_lea.sflag [#allocation3], %s212
        %s214 = sand.u32 %s30, 1
        %s215 = smul.addr %s214, 32
        %s216 = scalar_lea.vmem [#allocation2], %s215
        // Predicated region
        $region41: #{tpu_custom_call.1} parent=39 // pred_check
          %p217 = pneg %p43
        $region42: #{tpu_custom_call.1} parent=39 // pred_check_branch
          %219 = sbr.rel (%p217) target = $region44
        $region43: #{tpu_custom_call.1} parent=39 // pred_region
          %220 = dma.done %s213, 512
        $region44: #{tpu_custom_call.1} parent=39 // pred_fallthru
          _
        %s221 = sand.u32 %s30, 1
        %s222 = scalar_lea.sflag [#allocation3], %s221
        %s223 = sand.u32 %s30, 1
        %s224 = smul.addr %s223, 32
        %s225 = scalar_lea.vmem [#allocation2], %s224
        %p226 = pneg %p43
        %p227 = pneg %p40
        %p228 = pneg %p64
        %p229 = pneg %p61
        %p230 = pneg %p85
        %p231 = pneg %p82
        %p232 = pneg %p106
        %p233 = pneg %p103
        %p234 = pneg %p127
        %p235 = pneg %p124
        %p236 = pneg %p153
        %p237 = pneg %p150
        %s238 = sand.u32 %s140, 1
        %s239 = scalar_lea.sflag [#allocation4], %s238
        %s240 = sand.u32 %s140, 1
        %s241 = smul.addr %s240, 32
        %s242 = scalar_lea.vmem [#allocation5], %s241
        %v243 = vld [vmem:[%s216] sm:$0xff]
        %v244 = vld [vmem:[%s216 + $0x8] sm:$0xff]
        %v245 = vld [vmem:[%s216 + $0x10] sm:$0xff]
        %v246 = vld [vmem:[%s216 + $0x18] sm:$0xff]
        %247 = vmatprep.subr.mxu0 0.0
        %248 = vmatpush1.msra.mxu0 1.0
        %249 = vmatprep.subr.mxu0 0.0
        %250 = vmatpush1.msra.mxu0 1.0
        %251 = vmatprep.subr.mxu0 0.0
        %252 = vmatpush1.msra.mxu0 1.0
        %253 = vmatprep.subr.mxu0 0.0
        %254 = vmatpush1.msra.mxu0 1.0
        %255 = vmatprep.subr.mxu0 0.0
        %256 = vmatpush1.msra.mxu0 1.0
        %257 = vmatprep.subr.mxu0 0.0
        %258 = vmatpush1.msra.mxu0 1.0
        %259 = vmatprep.subr.mxu0 0.0
        %260 = vmatpush1.msra.mxu0 1.0
        %261 = vmatprep.subr.mxu0 0.0
        %262 = vmatpush1.msra.mxu0 1.0
        %263 = vmatprep.subr.mxu0 0.0
        %264 = vmatpush1.msra.mxu0 1.0
        %265 = vmatprep.subr.mxu0 0.0
        %266 = vmatpush1.msra.mxu0 1.0
        %267 = vmatprep.subr.mxu0 0.0
        %268 = vmatpush1.msra.mxu0 1.0
        %269 = vmatprep.subr.mxu0 0.0
        %270 = vmatpush1.msra.mxu0 1.0
        %271 = vmatprep.subr.mxu0 0.0
        %272 = vmatpush1.msra.mxu0 1.0
        %273 = vmatprep.subr.mxu0 0.0
        %274 = vmatpush1.msra.mxu0 1.0
        %275 = vmatprep.subr.mxu0 0.0
        %276 = vmatpush1.msra.mxu0 1.0
        %277 = vmatprep.subr.mxu0 0.0
        %278 = vmatpush1.msra.mxu0 1.0
        %279 = vmatprep.subr.mxu0 0.0
        %280 = vmatpush1.msra.mxu0 1.0
        %281 = vmatprep.subr.mxu0 0.0
        %282 = vmatpush1.msra.mxu0 1.0
        %283 = vmatprep.subr.mxu0 0.0
        %284 = vmatpush1.msra.mxu0 1.0
        %285 = vmatprep.subr.mxu0 0.0
        %286 = vmatpush1.msra.mxu0 1.0
        %287 = vmatprep.subr.mxu0 0.0
        %288 = vmatpush1.msra.mxu0 1.0
        %289 = vmatprep.subr.mxu0 0.0
        %290 = vmatpush1.msra.mxu0 1.0
        %291 = vmatprep.subr.mxu0 0.0
        %292 = vmatpush1.msra.mxu0 1.0
        %293 = vmatprep.subr.mxu0 0.0
        %294 = vmatpush1.msra.mxu0 1.0
        %295 = vmatprep.subr.mxu0 0.0
        %296 = vmatpush1.msra.mxu0 1.0
        %297 = vmatprep.subr.mxu0 0.0
        %298 = vmatpush1.msra.mxu0 1.0
        %299 = vmatprep.subr.mxu0 0.0
        %300 = vmatpush1.msra.mxu0 1.0
        %301 = vmatprep.subr.mxu0 0.0
        %302 = vmatpush1.msra.mxu0 1.0
        %303 = vmatprep.subr.mxu0 0.0
        %304 = vmatpush1.msra.mxu0 1.0
        %305 = vmatprep.subr.mxu0 0.0
        %306 = vmatpush1.msra.mxu0 1.0
        %307 = vmatprep.subr.mxu0 0.0
        %308 = vmatpush1.msra.mxu0 1.0
        %309 = vmatprep.subr.mxu0 0.0
        %310 = vmatpush1.msra.mxu0 1.0
        %311 = vmatprep.mubr.f32.mxu0 %v244
        %312 = vmatmul.mubr.f32.gmra.mrb[0].mxu0 %v243
        %v313 = vpop.f32.mrb[0].mxu0
        %v314 = vadd.f32 0.0, %v313
        %v315 = vpop.f32.mrb[0].mxu0
        %316 = vmatprep.mubr.f32.mxu0 %v246
        %317 = vmatmul.mubr.f32.gmra.mrb[0].mxu0 %v245
        %v318 = vpop.f32.mrb[0].mxu0
        %v319 = vadd.f32 0.0, %v318
        %v320 = vpop.f32.mrb[0].mxu0
        %321 = vdwg.mxu0
        %v322 = vmul.f32 %v314, 0.00390625
        %v323 = vmul.f32 %v319, 0.00390625
        %v324 = vld [vmem:[%s1] sm:$0xff]
        %v325 = vld [vmem:[%s2] sm:$0xff]
        %vm326 = vcmask 130048
        %v328 = vsel %vm326, %v324, 0
        %330 = vmatprep.subr.mxu0 0.0
        %331 = vmatpush1.msra.mxu0 %v322
        %332 = vmatprep.subr.mxu0 0.0
        %333 = vmatpush1.msra.mxu0 %v323
        %334 = vmatprep.subr.mxu0 0.0
        %335 = vmatpush1.msra.mxu0 0.0
        %336 = vmatprep.subr.mxu0 0.0
        %337 = vmatpush1.msra.mxu0 0.0
        %338 = vmatprep.subr.mxu0 0.0
        %339 = vmatpush1.msra.mxu0 0.0
        %340 = vmatprep.subr.mxu0 0.0
        %341 = vmatpush1.msra.mxu0 0.0
        %342 = vmatprep.subr.mxu0 0.0
        %343 = vmatpush1.msra.mxu0 0.0
        %344 = vmatprep.subr.mxu0 0.0
        %345 = vmatpush1.msra.mxu0 0.0
        %346 = vmatprep.subr.mxu0 0.0
        %347 = vmatpush1.msra.mxu0 0.0
        %348 = vmatprep.subr.mxu0 0.0
        %349 = vmatpush1.msra.mxu0 0.0
        %350 = vmatprep.subr.mxu0 0.0
        %351 = vmatpush1.msra.mxu0 0.0
        %352 = vmatprep.subr.mxu0 0.0
        %353 = vmatpush1.msra.mxu0 0.0
        %354 = vmatprep.subr.mxu0 0.0
        %355 = vmatpush1.msra.mxu0 0.0
        %356 = vmatprep.subr.mxu0 0.0
        %357 = vmatpush1.msra.mxu0 0.0
        %358 = vmatprep.subr.mxu0 0.0
        %359 = vmatpush1.msra.mxu0 0.0
        %360 = vmatprep.subr.mxu0 0.0
        %361 = vmatpush1.msra.mxu0 0.0
        %362 = vmatprep.subr.mxu0 0.0
        %363 = vmatpush1.msra.mxu0 0.0
        %364 = vmatprep.subr.mxu0 0.0
        %365 = vmatpush1.msra.mxu0 0.0
        %366 = vmatprep.subr.mxu0 0.0
        %367 = vmatpush1.msra.mxu0 0.0
        %368 = vmatprep.subr.mxu0 0.0
        %369 = vmatpush1.msra.mxu0 0.0
        %370 = vmatprep.subr.mxu0 0.0
        %371 = vmatpush1.msra.mxu0 0.0
        %372 = vmatprep.subr.mxu0 0.0
        %373 = vmatpush1.msra.mxu0 0.0
        %374 = vmatprep.subr.mxu0 0.0
        %375 = vmatpush1.msra.mxu0 0.0
        %376 = vmatprep.subr.mxu0 0.0
        %377 = vmatpush1.msra.mxu0 0.0
        %378 = vmatprep.subr.mxu0 0.0
        %379 = vmatpush1.msra.mxu0 0.0
        %380 = vmatprep.subr.mxu0 0.0
        %381 = vmatpush1.msra.mxu0 0.0
        %382 = vmatprep.subr.mxu0 0.0
        %383 = vmatpush1.msra.mxu0 0.0
        %384 = vmatprep.subr.mxu0 0.0
        %385 = vmatpush1.msra.mxu0 0.0
        %386 = vmatprep.subr.mxu0 0.0
        %387 = vmatpush1.msra.mxu0 0.0
        %388 = vmatprep.subr.mxu0 0.0
        %389 = vmatpush1.msra.mxu0 0.0
        %390 = vmatprep.subr.mxu0 0.0
        %391 = vmatpush1.msra.mxu0 0.0
        %392 = vmatprep.subr.mxu0 0.0
        %393 = vmatpush1.msra.mxu0 0.0
        %394 = vmatprep.mubr.f32.mxu0 0.0
        %395 = vmatmul.mubr.f32.gmra.mrb[0].mxu0 %v328
        %v396 = vpop.f32.mrb[0].mxu0
        %v397 = vadd.f32 %v325, %v396
        %v398 = vpop.f32.mrb[0].mxu0
        %399 = vdwg.mxu0
        %v400 = vmax.f32 %v397, 0.0
        %v401 = vld [vmem:[%s3] sm:$0xff]
        %v402 = vld [vmem:[%s3 + $0x8] sm:$0xff]
        %v403 = vld [vmem:[%s4] sm:$0xff]
        %v404 = vld [vmem:[%s4 + $0x8] sm:$0xff]
        %vm405 = vcmask 64512
        %v407 = vsel %vm405, %v401, 0
        %v410 = vsel %vm405, %v402, 0
        %412 = vmatprep.subr.mxu0 0.0
        %413 = vmatpush1.msra.mxu0 %v400
        %414 = vmatprep.subr.mxu0 0.0
        %415 = vmatpush1.msra.mxu0 0.0
        %416 = vmatprep.subr.mxu0 0.0
        %417 = vmatpush1.msra.mxu0 0.0
        %418 = vmatprep.subr.mxu0 0.0
        %419 = vmatpush1.msra.mxu0 0.0
        %420 = vmatprep.subr.mxu0 0.0
        %421 = vmatpush1.msra.mxu0 0.0
        %422 = vmatprep.subr.mxu0 0.0
        %423 = vmatpush1.msra.mxu0 0.0
        %424 = vmatprep.subr.mxu0 0.0
        %425 = vmatpush1.msra.mxu0 0.0
        %426 = vmatprep.subr.mxu0 0.0
        %427 = vmatpush1.msra.mxu0 0.0
        %428 = vmatprep.subr.mxu0 0.0
        %429 = vmatpush1.msra.mxu0 0.0
        %430 = vmatprep.subr.mxu0 0.0
        %431 = vmatpush1.msra.mxu0 0.0
        %432 = vmatprep.subr.mxu0 0.0
        %433 = vmatpush1.msra.mxu0 0.0
        %434 = vmatprep.subr.mxu0 0.0
        %435 = vmatpush1.msra.mxu0 0.0
        %436 = vmatprep.subr.mxu0 0.0
        %437 = vmatpush1.msra.mxu0 0.0
        %438 = vmatprep.subr.mxu0 0.0
        %439 = vmatpush1.msra.mxu0 0.0
        %440 = vmatprep.subr.mxu0 0.0
        %441 = vmatpush1.msra.mxu0 0.0
        %442 = vmatprep.subr.mxu0 0.0
        %443 = vmatpush1.msra.mxu0 0.0
        %444 = vmatprep.subr.mxu0 0.0
        %445 = vmatpush1.msra.mxu0 0.0
        %446 = vmatprep.subr.mxu0 0.0
        %447 = vmatpush1.msra.mxu0 0.0
        %448 = vmatprep.subr.mxu0 0.0
        %449 = vmatpush1.msra.mxu0 0.0
        %450 = vmatprep.subr.mxu0 0.0
        %451 = vmatpush1.msra.mxu0 0.0
        %452 = vmatprep.subr.mxu0 0.0
        %453 = vmatpush1.msra.mxu0 0.0
        %454 = vmatprep.subr.mxu0 0.0
        %455 = vmatpush1.msra.mxu0 0.0
        %456 = vmatprep.subr.mxu0 0.0
        %457 = vmatpush1.msra.mxu0 0.0
        %458 = vmatprep.subr.mxu0 0.0
        %459 = vmatpush1.msra.mxu0 0.0
        %460 = vmatprep.subr.mxu0 0.0
        %461 = vmatpush1.msra.mxu0 0.0
        %462 = vmatprep.subr.mxu0 0.0
        %463 = vmatpush1.msra.mxu0 0.0
        %464 = vmatprep.subr.mxu0 0.0
        %465 = vmatpush1.msra.mxu0 0.0
        %466 = vmatprep.subr.mxu0 0.0
        %467 = vmatpush1.msra.mxu0 0.0
        %468 = vmatprep.subr.mxu0 0.0
        %469 = vmatpush1.msra.mxu0 0.0
        %470 = vmatprep.subr.mxu0 0.0
        %471 = vmatpush1.msra.mxu0 0.0
        %472 = vmatprep.subr.mxu0 0.0
        %473 = vmatpush1.msra.mxu0 0.0
        %474 = vmatprep.subr.mxu0 0.0
        %475 = vmatpush1.msra.mxu0 0.0
        %476 = vmatprep.mubr.f32.mxu0 0.0
        %477 = vmatmul.mubr.f32.gmra.mrb[0].mxu0 %v407
        %v478 = vpop.f32.mrb[0].mxu0
        %v479 = vadd.f32 %v403, %v478
        %v480 = vpop.f32.mrb[0].mxu0
        %481 = vmatprep.mubr.f32.mxu0 0.0
        %482 = vmatmul.mubr.f32.gmra.mrb[0].mxu0 %v410
        %v483 = vpop.f32.mrb[0].mxu0
        %v484 = vadd.f32 %v404, %v483
        %v485 = vpop.f32.mrb[0].mxu0
        %486 = vdwg.mxu0
        %v487 = vmul.f32 %v479, 0.16666667
        %v488 = vmul.f32 %v484, 0.16666667
        %v489 = vadd.f32 %v487, 0.5
        %v490 = vadd.f32 %v488, 0.5
        %v491 = vmax.f32 %v489, 0.0
        %v492 = vmax.f32 %v490, 0.0
        %v493 = vmin.f32 %v491, 1.0
        %v494 = vmin.f32 %v492, 1.0
        %496 = vset.pattern.permute.xlu0 0
        %497 = vperm.xlu0 %496, %v493
        %v498 = vpop.permute.xlu0 %497
        %501 = vset.pattern.permute.xlu0 0
        %502 = vperm.xlu0 %501, %v494
        %v503 = vpop.permute.xlu0 %502
        %v505 = vmul.f32 %v243, %v498
        %v506 = vmul.f32 %v244, %v498
        %v507 = vmul.f32 %v245, %v503
        %v508 = vmul.f32 %v246, %v503
        %509 = vst [vmem:[%s242] sm:$0xff] %v505
        %510 = vst [vmem:[%s242 + $0x8] sm:$0xff] %v506
        %511 = vst [vmem:[%s242 + $0x10] sm:$0xff] %v507
        %512 = vst [vmem:[%s242 + $0x18] sm:$0xff] %v508
        %s513 = sand.u32 %s140, 1
        %s514 = scalar_lea.sflag [#allocation4], %s513
        %s515 = sand.u32 %s140, 1
        %s516 = smul.addr %s515, 32
        %s517 = scalar_lea.vmem [#allocation5], %s516
        // Predicated region
        $region45: #{tpu_custom_call.1} parent=39 // pred_check
          %p518 = pneg %p150
        $region46: #{tpu_custom_call.1} parent=39 // pred_check_branch
          %520 = sbr.rel (%p518) target = $region48
        $region47: #{tpu_custom_call.1} parent=39 // pred_region
          %s522 = ssub.s32 512, 512
          %523 = vsyncadd %s514, %s522
          %s524 = smul.addr %s22, 4
          %s525 = smul.addr %s524, 128
          %s526 = scalar_lea.hbm %s5, %s525
          %s527 = sshll.u32 %s517, 4
          %s528 = int_to_ptr.vmem [resolvable:$true] %s527
          %533 = dma.vmem_to_hbm [thread:$0]  %s528, 512, %s526, %s514, 256, 256, 16
        $region48: #{tpu_custom_call.1} parent=39 // pred_fallthru
          _
      $region40: #{tpu_custom_call.1} parent=5 // pred_fallthru
        _
      %p534 = scmp.le.s32.totalorder 2, %s17
      // Predicated region
      $region49: #{tpu_custom_call.1} parent=5 // pred_check
        %p535 = pneg %p534
      $region50: #{tpu_custom_call.1} parent=5 // pred_check_branch
        %537 = sbr.rel (%p535) target = $region52
      $region51: #{tpu_custom_call.1} parent=5 // pred_region
        %s538 = ssub.s32 %s17, 2
        // Predicated region
        $region53: #{tpu_custom_call.1} parent=51 // pred_check
          %p539 = pneg %p156
        $region54: #{tpu_custom_call.1} parent=51 // pred_check_branch
          %541 = sbr.rel (%p539) target = $region56
        $region55: #{tpu_custom_call.1} parent=51 // pred_region
          %s542 = sand.u32 %s141, 1
          %s543 = scalar_lea.sflag [#allocation4], %s542
          %s544 = sand.u32 %s141, 1
          %s545 = smul.addr %s544, 32
          %s546 = scalar_lea.vmem [#allocation5], %s545
          %547 = dma.done %s543, 512
        $region56: #{tpu_custom_call.1} parent=51 // pred_fallthru
          _
      $region52: #{tpu_custom_call.1} parent=5 // pred_fallthru
        _
    $region6: #{tpu_custom_call.1} parent=1 // loop_footer
      %s21 = sadd.s32 1, %s17
    $region7: #{tpu_custom_call.1} parent=1 // loop_footer_branch
      %16 = sbr.rel target = $region3
    $region8: #{tpu_custom_call.1} parent=1 // loop_exit
      _
    %548 = vsyncpa [#allocation3], 1
    %s549 = scalar_lea.sflag [#allocation3], 1
    %550 = vsyncpa %s549, 1
    %551 = vsyncpa [#allocation4], 1
    %s552 = scalar_lea.sflag [#allocation4], 1
    %553 = vsyncpa %s552, 1

</llo_original>
